<compile_context>
chip_gen: v7x
topology: tpu7x:2x2x1
jax: 0.10.0
libtpu: 0.0.40
codegen_flags: <defaults>
</compile_context>

<pallas_src>
import functools

import jax
import jax.numpy as jnp
from jax.experimental import pallas as pl
from jax.experimental.pallas import tpu as pltpu

# ---------------- model config (small synthetic shapes) ----------------
OBS_DIM = 16
ACT_DIM = 4
HIDDEN_SIZES = (32, 32)
ACT_LIMIT = 2.0
BATCH = 8

PAD = 128                 # lane-padded feature width for hidden layers
SLAB_ROWS = PAD + 16      # 128 weight rows + 1 bias row, padded to 144 (x16)
NUM_LAYERS = 3


def _round_up(x, m):
    return (x + m - 1) // m * m


# --------------------------- Pallas kernel ------------------------------
def _actor_kernel(obs_ref, params_ref, out_ref):
    """Fused 3-layer MLP on one [tile_b, OBS_DIM] row tile.

    obs_ref   : [tile_b, OBS_DIM] bf16
    params_ref: [3, 144, 128]     bf16  (rows 0..127 = W_l, row 128 = b_l)
    out_ref   : [tile_b, ACT_DIM] f32
    """
    x = obs_ref[...]  # bf16

    def bias(l):
        # Tile-aligned 16-sublane bf16 load; keep row 0, cast only that row.
        return params_ref[l, PAD:PAD + 16, :][0:1, :].astype(jnp.float32)

    # Layer 1: contract only the real OBS_DIM weight rows (padded rows are 0).
    w1 = params_ref[0, 0:OBS_DIM, :]                                  # [16,128]
    h = jnp.dot(x, w1, preferred_element_type=jnp.float32) + bias(0)  # MXU+VPU
    h = jnp.maximum(h, 0.0)

    # Layer 2: full 128x128 weight tile.
    w2 = params_ref[1, 0:PAD, :]
    h = jnp.dot(h.astype(jnp.bfloat16), w2,
                preferred_element_type=jnp.float32) + bias(1)
    h = jnp.maximum(h, 0.0)

    # Layer 3 + Tanh output activation scaled by act_limit.
    w3 = params_ref[2, 0:PAD, :]
    h = jnp.dot(h.astype(jnp.bfloat16), w3,
                preferred_element_type=jnp.float32) + bias(2)
    # Only the first ACT_DIM lanes are meaningful -> tanh and store just those.
    out_ref[...] = (ACT_LIMIT * jnp.tanh(h[:, 0:ACT_DIM])).astype(out_ref.dtype)


# ----------------------------- wrapper ----------------------------------
@functools.partial(jax.jit, static_argnames=("tile_b",))
def mlp_actor_forward(obs, packed_params, *, tile_b=1024):
    """obs: [B, OBS_DIM] f32; packed_params: [3, 144, 128] bf16."""
    B, obs_dim = obs.shape
    assert obs_dim == OBS_DIM

    # Row tile: large enough to amortize per-grid-step overhead, clamped to
    # the (8-aligned) batch for small inputs.
    B8 = _round_up(B, 8)
    tb = min(tile_b, B8)
    # v7x megacore: keep >= 2 "parallel" grid steps when each half still has
    # >= 512 rows; a grid of (1,) would leave one TensorCore idle.
    if tb == B8 and B8 >= 1024:
        tb = _round_up(B8 // 2, 8)
    B_pad = _round_up(B, tb)

    # bf16 obs (it is cast to bf16 before the MXU anyway); pad batch rows only.
    obs_bf16 = obs.astype(jnp.bfloat16)
    if B_pad != B:
        obs_bf16 = jnp.pad(obs_bf16, ((0, B_pad - B), (0, 0)))

    grid = (B_pad // tb,)
    out = pl.pallas_call(
        _actor_kernel,
        out_shape=jax.ShapeDtypeStruct((B_pad, ACT_DIM), jnp.float32),
        grid=grid,
        in_specs=[
            # obs tile marches along the batch grid axis; last dim = full dim.
            pl.BlockSpec((tb, OBS_DIM), lambda i: (i, 0)),
            # single packed parameter slab, constant index_map -> fetched once
            # and VMEM-resident for every batch tile.
            pl.BlockSpec((NUM_LAYERS, SLAB_ROWS, PAD), lambda i: (0, 0, 0)),
        ],
        out_specs=pl.BlockSpec((tb, ACT_DIM), lambda i: (i, 0)),
        compiler_params=pltpu.CompilerParams(
            dimension_semantics=("parallel",),
            # Plenty of headroom even for very large tiles; safely below the
            # physical VMEM of every generation (v5e default would be 16 MiB).
            vmem_limit_bytes=32 * 1024 * 1024,
        ),
    )(obs_bf16, packed_params)

    return out[:B]


# --------------------------- param handling -----------------------------
def init_params(key):
    """PyTorch Linear default init: U[-1/sqrt(fan_in), 1/sqrt(fan_in)]."""
    sizes = [OBS_DIM] + list(HIDDEN_SIZES) + [ACT_DIM]
    params = {}
    keys = jax.random.split(key, 2 * (len(sizes) - 1))
    for i, (fan_in, fan_out) in enumerate(zip(sizes[:-1], sizes[1:])):
        bound = 1.0 / jnp.sqrt(float(fan_in))
        w = jax.random.uniform(keys[2 * i], (fan_in, fan_out), jnp.float32,
                               -bound, bound)
        b = jax.random.uniform(keys[2 * i + 1], (1, fan_out), jnp.float32,
                               -bound, bound)
        params[f"w{i + 1}"] = w
        params[f"b{i + 1}"] = b
    return params


def pack_params(params):
    """Pack (W_l, b_l) for all layers into one zero-padded bf16 slab.

    slab[l, 0:128, :]  = W_l (padded to 128x128)
    slab[l, 128, :]    = b_l (padded to 128)
    """
    assert all(s <= PAD for s in [OBS_DIM, ACT_DIM, *HIDDEN_SIZES])
    slab = jnp.zeros((NUM_LAYERS, SLAB_ROWS, PAD), jnp.float32)
    for l in range(NUM_LAYERS):
        w = params[f"w{l + 1}"]
        b = params[f"b{l + 1}"].reshape(-1)
        fan_in, fan_out = w.shape
        slab = slab.at[l, :fan_in, :fan_out].set(w)
        slab = slab.at[l, PAD, :fan_out].set(b)
    return slab.astype(jnp.bfloat16)


# ----------------------------- reference --------------------------------
def mlp_actor_reference(obs, packed_params):
    """Plain-JAX reference with the same (bf16-operand, f32-acc) numerics."""
    p = packed_params.astype(jnp.float32)
    x = obs.astype(jnp.bfloat16).astype(jnp.float32)
    w_rows = [OBS_DIM, PAD, PAD]
    for l in range(NUM_LAYERS):
        w = p[l, :w_rows[l], :]
        b = p[l, PAD:PAD + 1, :]
        h = jnp.dot(x, w, precision=jax.lax.Precision.HIGHEST) + b
        if l < NUM_LAYERS - 1:
            x = jnp.maximum(h, 0.0).astype(jnp.bfloat16).astype(jnp.float32)
        else:
            x = h
    return (ACT_LIMIT * jnp.tanh(x))[:, :ACT_DIM]


# ------------------------------- main ------------------------------------
if __name__ == "__main__":
    key = jax.random.PRNGKey(0)
    k_obs, k_params, k_big = jax.random.split(key, 3)

    params = init_params(k_params)
    packed = pack_params(params)

    # Small batch: grid collapses to a single step (pure fixed-overhead path).
    obs = jax.random.normal(k_obs, (BATCH, OBS_DIM), dtype=jnp.float32)
    out = jax.block_until_ready(mlp_actor_forward(obs, packed))
    ref = mlp_actor_reference(obs, packed)
    assert out.shape == (BATCH, ACT_DIM)
    assert jnp.allclose(out, ref, atol=1e-4, rtol=1e-4), "small-batch mismatch"

    # Larger batch: exercises the multi-step "parallel" grid (2 x 1024 rows).
    obs_big = jax.random.normal(k_big, (2048, OBS_DIM), dtype=jnp.float32)
    out_big = jax.block_until_ready(mlp_actor_forward(obs_big, packed))
    ref_big = mlp_actor_reference(obs_big, packed)
    assert out_big.shape == (2048, ACT_DIM)
    assert jnp.allclose(out_big, ref_big, atol=1e-4, rtol=1e-4), "big-batch mismatch"

    print("KERNEL_OK")
</pallas_src>

<mosaic_0001>
module attributes {stable_mosaic.version = 11 : i64} {
  func.func @_actor_kernel(%arg0: i32, %arg1: memref<8x16xbf16, #tpu.memory_space<vmem>>, %arg2: memref<3x144x128xbf16, #tpu.memory_space<vmem>>, %arg3: memref<8x4xf32, #tpu.memory_space<vmem>>) attributes {dimension_semantics = [#tpu.dimension_semantics<parallel>], iteration_bounds = array<i64: 1>, scalar_prefetch = 0 : i64, scratch_operands = 0 : i64, tpu.core_type = #tpu.core_type<tc>, window_params = [{transform_indices = @transform_0, window_bounds = array<i64: 8, 16>}, {pipeline_mode = #tpu.pipeline_mode<synchronous>, transform_indices = @transform_1, window_bounds = array<i64: 3, 144, 128>}, {transform_indices = @transform_2, window_bounds = array<i64: 8, 4>}]} {
    %c0 = arith.constant 0 : index
    %c0_0 = arith.constant 0 : index
    %0 = vector.load %arg1[%c0, %c0_0] : memref<8x16xbf16, #tpu.memory_space<vmem>>, vector<8x16xbf16>
    %c0_1 = arith.constant 0 : index
    %c0_2 = arith.constant 0 : index
    %c0_3 = arith.constant 0 : index
    %1 = vector.load %arg2[%c0_1, %c0_2, %c0_3] : memref<3x144x128xbf16, #tpu.memory_space<vmem>>, vector<1x16x128xbf16>
    %2 = vector.shape_cast %1 : vector<1x16x128xbf16> to vector<16x128xbf16>
    %cst = arith.constant dense<0.000000e+00> : vector<8x128xf32>
    %3 = tpu.matmul %0, %2, %cst {dimension_numbers = #tpu.dot_dimension_numbers<[1], [0], [0], [1], [0, 0, 1, 1], [], []>} : vector<8x16xbf16>, vector<16x128xbf16>, vector<8x128xf32> -> vector<8x128xf32>
    %c0_4 = arith.constant 0 : index
    %c128 = arith.constant 128 : index
    %c0_5 = arith.constant 0 : index
    %4 = vector.load %arg2[%c0_4, %c128, %c0_5] : memref<3x144x128xbf16, #tpu.memory_space<vmem>>, vector<1x16x128xbf16>
    %5 = vector.shape_cast %4 : vector<1x16x128xbf16> to vector<16x128xbf16>
    %6 = vector.extract_strided_slice %5 {offsets = [0, 0], sizes = [1, 128], strides = [1, 1]} : vector<16x128xbf16> to vector<1x128xbf16>
    %7 = arith.extf %6 : vector<1x128xbf16> to vector<1x128xf32>
    %8 = vector.broadcast %7 : vector<1x128xf32> to vector<8x128xf32>
    %9 = arith.addf %3, %8 : vector<8x128xf32>
    %cst_6 = arith.constant 0.000000e+00 : f32
    %10 = vector.broadcast %cst_6 : f32 to vector<8x128xf32>
    %11 = arith.maximumf %9, %10 : vector<8x128xf32>
    %c1 = arith.constant 1 : index
    %c0_7 = arith.constant 0 : index
    %c0_8 = arith.constant 0 : index
    %12 = vector.load %arg2[%c1, %c0_7, %c0_8] : memref<3x144x128xbf16, #tpu.memory_space<vmem>>, vector<1x128x128xbf16>
    %13 = vector.shape_cast %12 : vector<1x128x128xbf16> to vector<128x128xbf16>
    %14 = arith.truncf %11 : vector<8x128xf32> to vector<8x128xbf16>
    %cst_9 = arith.constant dense<0.000000e+00> : vector<8x128xf32>
    %15 = tpu.matmul %14, %13, %cst_9 {dimension_numbers = #tpu.dot_dimension_numbers<[1], [0], [0], [1], [0, 0, 1, 1], [], []>} : vector<8x128xbf16>, vector<128x128xbf16>, vector<8x128xf32> -> vector<8x128xf32>
    %c1_10 = arith.constant 1 : index
    %c128_11 = arith.constant 128 : index
    %c0_12 = arith.constant 0 : index
    %16 = vector.load %arg2[%c1_10, %c128_11, %c0_12] : memref<3x144x128xbf16, #tpu.memory_space<vmem>>, vector<1x16x128xbf16>
    %17 = vector.shape_cast %16 : vector<1x16x128xbf16> to vector<16x128xbf16>
    %18 = vector.extract_strided_slice %17 {offsets = [0, 0], sizes = [1, 128], strides = [1, 1]} : vector<16x128xbf16> to vector<1x128xbf16>
    %19 = arith.extf %18 : vector<1x128xbf16> to vector<1x128xf32>
    %20 = vector.broadcast %19 : vector<1x128xf32> to vector<8x128xf32>
    %21 = arith.addf %15, %20 : vector<8x128xf32>
    %cst_13 = arith.constant 0.000000e+00 : f32
    %22 = vector.broadcast %cst_13 : f32 to vector<8x128xf32>
    %23 = arith.maximumf %21, %22 : vector<8x128xf32>
    %c2 = arith.constant 2 : index
    %c0_14 = arith.constant 0 : index
    %c0_15 = arith.constant 0 : index
    %24 = vector.load %arg2[%c2, %c0_14, %c0_15] : memref<3x144x128xbf16, #tpu.memory_space<vmem>>, vector<1x128x128xbf16>
    %25 = vector.shape_cast %24 : vector<1x128x128xbf16> to vector<128x128xbf16>
    %26 = arith.truncf %23 : vector<8x128xf32> to vector<8x128xbf16>
    %cst_16 = arith.constant dense<0.000000e+00> : vector<8x128xf32>
    %27 = tpu.matmul %26, %25, %cst_16 {dimension_numbers = #tpu.dot_dimension_numbers<[1], [0], [0], [1], [0, 0, 1, 1], [], []>} : vector<8x128xbf16>, vector<128x128xbf16>, vector<8x128xf32> -> vector<8x128xf32>
    %c2_17 = arith.constant 2 : index
    %c128_18 = arith.constant 128 : index
    %c0_19 = arith.constant 0 : index
    %28 = vector.load %arg2[%c2_17, %c128_18, %c0_19] : memref<3x144x128xbf16, #tpu.memory_space<vmem>>, vector<1x16x128xbf16>
    %29 = vector.shape_cast %28 : vector<1x16x128xbf16> to vector<16x128xbf16>
    %30 = vector.extract_strided_slice %29 {offsets = [0, 0], sizes = [1, 128], strides = [1, 1]} : vector<16x128xbf16> to vector<1x128xbf16>
    %31 = arith.extf %30 : vector<1x128xbf16> to vector<1x128xf32>
    %32 = vector.broadcast %31 : vector<1x128xf32> to vector<8x128xf32>
    %33 = arith.addf %27, %32 : vector<8x128xf32>
    %34 = vector.extract_strided_slice %33 {offsets = [0, 0], sizes = [8, 4], strides = [1, 1]} : vector<8x128xf32> to vector<8x4xf32>
    %35 = math.tanh %34 : vector<8x4xf32>
    %cst_20 = arith.constant 2.000000e+00 : f32
    %36 = vector.broadcast %cst_20 : f32 to vector<8x4xf32>
    %37 = arith.mulf %36, %35 : vector<8x4xf32>
    %c0_21 = arith.constant 0 : index
    %c0_22 = arith.constant 0 : index
    %38 = vector.load %arg3[%c0_21, %c0_22] : memref<8x4xf32, #tpu.memory_space<vmem>>, vector<8x4xf32>
    tpu.vector_store %arg3[%c0_21, %c0_22], %37 {strides = array<i32>} : memref<8x4xf32, #tpu.memory_space<vmem>>, vector<8x4xf32>,
    return
  }
  func.func @transform_0(%arg0: i32) -> (i32, i32) {
    %c0_i32 = arith.constant 0 : i32
    %c0_i32_0 = arith.constant 0 : i32
    return %arg0, %c0_i32 : i32, i32
  }
  func.func @transform_1(%arg0: i32) -> (i32, i32, i32) {
    %c0_i32 = arith.constant 0 : i32
    %c0_i32_0 = arith.constant 0 : i32
    %c0_i32_1 = arith.constant 0 : i32
    %c0_i32_2 = arith.constant 0 : i32
    return %c0_i32, %c0_i32_0, %c0_i32_1 : i32, i32, i32
  }
  func.func @transform_2(%arg0: i32) -> (i32, i32) {
    %c0_i32 = arith.constant 0 : i32
    %c0_i32_0 = arith.constant 0 : i32
    return %arg0, %c0_i32 : i32, i32
  }
}

</mosaic_0001>

<llo_original>
// kernel: mlp_actor_forward.1
$region0: #{mlp_actor_forward.1}
  #allocation0 [shape = 'u32[]', space=smem, size = 0x4, offset = 0x4, fixed_abs, tag = 'smem constant byte address 0x4 - core index']
  #allocation1 [shape = 'u32[144,128]{1,0:T(1,128)}', space=vmem, size = 0x12000, scoped, tag = 'internal scratch']
  %s0 = inlined_call_operand.vmem [shape: bf16[8,16], index: 0, kind: input, shape index: {}]
  %s1 = inlined_call_operand.hbm [shape: bf16[3,144,128], index: 1, kind: input, shape index: {}]
  %s2 = inlined_call_operand.vmem [shape: f32[8,4], index: 2, kind: output, shape index: {}]
  %s3 = sld [smem:[#allocation0]]
  $region22: #{mlp_actor_forward.1} parent=0
    _
  %s5 = ssub.s32 1, %s3
  %s6 = scalar_select 0, %s5, %s3
  $region1: #{mlp_actor_forward.1} parent=0
    #allocation2 [shape = 'u8[110592]{0}', space=vmem, size = 0x1b000, scoped, tag = 'input window, operand 1, single buffered']
    #allocation3 [shape = 's32[1]{0}', space=sflag, size = 0x4, scoped, tag = 'scoped memory for mlp_actor_forward.1']
    %7 = vsyncpa [#allocation3], 0
    // Predicated region
    $region2: #{mlp_actor_forward.1} parent=1 // pred_check
      _
    $region3: #{mlp_actor_forward.1} parent=1 // pred_check_branch
      %9 = sbr.rel (0) target = $region5
    $region4: #{mlp_actor_forward.1} parent=1 // pred_region
      _
    $region5: #{mlp_actor_forward.1} parent=1 // pred_fallthru
      _
    // Predicated region
    $region6: #{mlp_actor_forward.1} parent=1 // pred_check
      _
    $region7: #{mlp_actor_forward.1} parent=1 // pred_check_branch
      %11 = sbr.rel (0) target = $region9
    $region8: #{mlp_actor_forward.1} parent=1 // pred_region
      %s13 = ssub.s32 3456, 3456
      %14 = vsyncadd [#allocation3], %s13
      %s15 = sshll.u32 [#allocation2], 4
      %s16 = int_to_ptr.vmem [resolvable:$true] %s15
      %21 = dma.hbm_to_vmem [thread:$0]  %s1, 3456, %s16, [#allocation3], 64, 64, 4
    $region9: #{mlp_actor_forward.1} parent=1 // pred_fallthru
      _
    // Predicated region
    $region10: #{mlp_actor_forward.1} parent=1 // pred_check
      _
    $region11: #{mlp_actor_forward.1} parent=1 // pred_check_branch
      %23 = sbr.rel (0) target = $region13
    $region12: #{mlp_actor_forward.1} parent=1 // pred_region
      %24 = dma.done [#allocation3], 3456
    $region13: #{mlp_actor_forward.1} parent=1 // pred_fallthru
      _
    %v26 = vld [vmem:[%s0] sm:$0xf]
    %v27 = vld [vmem:[#allocation2] sm:$0xf]
    %v28 = vld [vmem:[#allocation2 + $0x4] sm:$0xf]
    %v29 = vld [vmem:[#allocation2 + $0x40] sm:$0xf]
    %v30 = vunpack.c.l.bf16 %v29
    %v31 = vlaneseq
    %v32 = vshrl.u32 %v31, 7
    %v33 = vsub.s32 0, %v32
    %v34 = vrot.slane %v30, %v33
    %v37 = vunpack.c.l.b16 %v27
    %v38 = vunpack.c.l.b16 %v28
    %v39 = vpack.c.b16 %v38, %v37
    %vm41 = vcmask 130048
    %v43 = vsel %vm41, %v26, 0
    %45 = vmatprep.subr.bf16.mxu0 0
    %46 = vmatpush1.bf16.msra.mxu0 %v39
    %47 = vmatprep.subr.bf16.mxu0 0
    %48 = vmatpush1.bf16.msra.mxu0 0
    %49 = vmatprep.subr.bf16.mxu0 0
    %50 = vmatpush1.bf16.msra.mxu0 0
    %51 = vmatprep.subr.bf16.mxu0 0
    %52 = vmatpush1.bf16.msra.mxu0 0
    %53 = vmatprep.subr.bf16.mxu0 0
    %54 = vmatpush1.bf16.msra.mxu0 0
    %55 = vmatprep.subr.bf16.mxu0 0
    %56 = vmatpush1.bf16.msra.mxu0 0
    %57 = vmatprep.subr.bf16.mxu0 0
    %58 = vmatpush1.bf16.msra.mxu0 0
    %59 = vmatprep.subr.bf16.mxu0 0
    %60 = vmatpush1.bf16.msra.mxu0 0
    %61 = vmatprep.subr.bf16.mxu0 0
    %62 = vmatpush1.bf16.msra.mxu0 0
    %63 = vmatprep.subr.bf16.mxu0 0
    %64 = vmatpush1.bf16.msra.mxu0 0
    %65 = vmatprep.subr.bf16.mxu0 0
    %66 = vmatpush1.bf16.msra.mxu0 0
    %67 = vmatprep.subr.bf16.mxu0 0
    %68 = vmatpush1.bf16.msra.mxu0 0
    %69 = vmatprep.subr.bf16.mxu0 0
    %70 = vmatpush1.bf16.msra.mxu0 0
    %71 = vmatprep.subr.bf16.mxu0 0
    %72 = vmatpush1.bf16.msra.mxu0 0
    %73 = vmatprep.subr.bf16.mxu0 0
    %74 = vmatpush1.bf16.msra.mxu0 0
    %75 = vmatprep.subr.bf16.mxu0 0
    %76 = vmatpush1.bf16.msra.mxu0 0
    %77 = vmatprep.mubr.bf16.mxu0 0
    %78 = vmatmul.mubr.bf16.gmra.mrb[0].mxu0 %v43
    %v79 = vpop.f32.mrb[0].mxu0
    %v80 = vadd.f32 %v34, %v79
    %v81 = vpop.f32.mrb[0].mxu0
    %v82 = vpop.f32.mrb[0].mxu0
    %v83 = vpop.f32.mrb[0].mxu0
    %84 = vdwg.mxu0
    %v85 = vmax.f32 %v80, 0.0
    %s86 = scalar_lea.vmem [#allocation2], 72
    %v87 = vld [vmem:[%s86] sm:$0xf]
    %v88 = vld [vmem:[%s86 + $0x4] sm:$0xf]
    %v89 = vld [vmem:[%s86 + $0x8] sm:$0xf]
    %v90 = vld [vmem:[%s86 + $0xc] sm:$0xf]
    %v91 = vld [vmem:[%s86 + $0x10] sm:$0xf]
    %v92 = vld [vmem:[%s86 + $0x14] sm:$0xf]
    %v93 = vld [vmem:[%s86 + $0x18] sm:$0xf]
    %v94 = vld [vmem:[%s86 + $0x1c] sm:$0xf]
    %v95 = vld [vmem:[%s86 + $0x20] sm:$0xf]
    %v96 = vld [vmem:[%s86 + $0x24] sm:$0xf]
    %v97 = vld [vmem:[%s86 + $0x28] sm:$0xf]
    %v98 = vld [vmem:[%s86 + $0x2c] sm:$0xf]
    %v99 = vld [vmem:[%s86 + $0x30] sm:$0xf]
    %v100 = vld [vmem:[%s86 + $0x34] sm:$0xf]
    %v101 = vld [vmem:[%s86 + $0x38] sm:$0xf]
    %v102 = vld [vmem:[%s86 + $0x3c] sm:$0xf]
    %v103 = vpack.c.bf16 %v85, %v85
    %v104 = vld [vmem:[%s86 + $0x40] sm:$0xf]
    %v105 = vunpack.c.l.bf16 %v104
    %v106 = vlaneseq
    %v107 = vshrl.u32 %v106, 7
    %v108 = vsub.s32 0, %v107
    %v109 = vrot.slane %v105, %v108
    %v126 = vunpack.c.l.b16 %v87
    %v127 = vunpack.c.l.b16 %v88
    %v128 = vunpack.c.l.b16 %v89
    %v129 = vunpack.c.l.b16 %v90
    %v130 = vunpack.c.l.b16 %v91
    %v131 = vunpack.c.l.b16 %v92
    %v132 = vunpack.c.l.b16 %v93
    %v133 = vunpack.c.l.b16 %v94
    %v134 = vunpack.c.l.b16 %v95
    %v135 = vunpack.c.l.b16 %v96
    %v136 = vunpack.c.l.b16 %v97
    %v137 = vunpack.c.l.b16 %v98
    %v138 = vunpack.c.l.b16 %v99
    %v139 = vunpack.c.l.b16 %v100
    %v140 = vunpack.c.l.b16 %v101
    %v141 = vunpack.c.l.b16 %v102
    %v142 = vpack.c.b16 %v127, %v126
    %v143 = vpack.c.b16 %v129, %v128
    %v144 = vpack.c.b16 %v131, %v130
    %v145 = vpack.c.b16 %v133, %v132
    %v146 = vpack.c.b16 %v135, %v134
    %v147 = vpack.c.b16 %v137, %v136
    %v148 = vpack.c.b16 %v139, %v138
    %v149 = vpack.c.b16 %v141, %v140
    %158 = vmatprep.subr.bf16.mxu0 0
    %159 = vmatpush1.bf16.msra.mxu0 %v142
    %160 = vmatprep.subr.bf16.mxu0 0
    %161 = vmatpush1.bf16.msra.mxu0 %v143
    %162 = vmatprep.subr.bf16.mxu0 0
    %163 = vmatpush1.bf16.msra.mxu0 %v144
    %164 = vmatprep.subr.bf16.mxu0 0
    %165 = vmatpush1.bf16.msra.mxu0 %v145
    %166 = vmatprep.subr.bf16.mxu0 0
    %167 = vmatpush1.bf16.msra.mxu0 %v146
    %168 = vmatprep.subr.bf16.mxu0 0
    %169 = vmatpush1.bf16.msra.mxu0 %v147
    %170 = vmatprep.subr.bf16.mxu0 0
    %171 = vmatpush1.bf16.msra.mxu0 %v148
    %172 = vmatprep.subr.bf16.mxu0 0
    %173 = vmatpush1.bf16.msra.mxu0 %v149
    %174 = vmatprep.subr.bf16.mxu0 0
    %175 = vmatpush1.bf16.msra.mxu0 0
    %176 = vmatprep.subr.bf16.mxu0 0
    %177 = vmatpush1.bf16.msra.mxu0 0
    %178 = vmatprep.subr.bf16.mxu0 0
    %179 = vmatpush1.bf16.msra.mxu0 0
    %180 = vmatprep.subr.bf16.mxu0 0
    %181 = vmatpush1.bf16.msra.mxu0 0
    %182 = vmatprep.subr.bf16.mxu0 0
    %183 = vmatpush1.bf16.msra.mxu0 0
    %184 = vmatprep.subr.bf16.mxu0 0
    %185 = vmatpush1.bf16.msra.mxu0 0
    %186 = vmatprep.subr.bf16.mxu0 0
    %187 = vmatpush1.bf16.msra.mxu0 0
    %188 = vmatprep.subr.bf16.mxu0 0
    %189 = vmatpush1.bf16.msra.mxu0 0
    %190 = vmatprep.mubr.bf16.mxu0 0
    %191 = vmatmul.mubr.bf16.gmra.mrb[0].mxu0 %v103
    %v192 = vpop.f32.mrb[0].mxu0
    %v193 = vadd.f32 %v109, %v192
    %v194 = vpop.f32.mrb[0].mxu0
    %v195 = vpop.f32.mrb[0].mxu0
    %v196 = vpop.f32.mrb[0].mxu0
    %197 = vdwg.mxu0
    %v198 = vmax.f32 %v193, 0.0
    %s199 = scalar_lea.vmem [#allocation2], 144
    %v200 = vld [vmem:[%s199] sm:$0xf]
    %v201 = vld [vmem:[%s199 + $0x4] sm:$0xf]
    %v202 = vld [vmem:[%s199 + $0x8] sm:$0xf]
    %v203 = vld [vmem:[%s199 + $0xc] sm:$0xf]
    %v204 = vld [vmem:[%s199 + $0x10] sm:$0xf]
    %v205 = vld [vmem:[%s199 + $0x14] sm:$0xf]
    %v206 = vld [vmem:[%s199 + $0x18] sm:$0xf]
    %v207 = vld [vmem:[%s199 + $0x1c] sm:$0xf]
    %v208 = vld [vmem:[%s199 + $0x20] sm:$0xf]
    %v209 = vld [vmem:[%s199 + $0x24] sm:$0xf]
    %v210 = vld [vmem:[%s199 + $0x28] sm:$0xf]
    %v211 = vld [vmem:[%s199 + $0x2c] sm:$0xf]
    %v212 = vld [vmem:[%s199 + $0x30] sm:$0xf]
    %v213 = vld [vmem:[%s199 + $0x34] sm:$0xf]
    %v214 = vld [vmem:[%s199 + $0x38] sm:$0xf]
    %v215 = vld [vmem:[%s199 + $0x3c] sm:$0xf]
    %v216 = vpack.c.bf16 %v198, %v198
    %v217 = vld [vmem:[%s199 + $0x40] sm:$0xf]
    %v218 = vunpack.c.l.bf16 %v217
    %v219 = vlaneseq
    %v220 = vshrl.u32 %v219, 7
    %v221 = vsub.s32 0, %v220
    %v222 = vrot.slane %v218, %v221
    %v239 = vunpack.c.l.b16 %v200
    %v240 = vunpack.c.l.b16 %v201
    %v241 = vunpack.c.l.b16 %v202
    %v242 = vunpack.c.l.b16 %v203
    %v243 = vunpack.c.l.b16 %v204
    %v244 = vunpack.c.l.b16 %v205
    %v245 = vunpack.c.l.b16 %v206
    %v246 = vunpack.c.l.b16 %v207
    %v247 = vunpack.c.l.b16 %v208
    %v248 = vunpack.c.l.b16 %v209
    %v249 = vunpack.c.l.b16 %v210
    %v250 = vunpack.c.l.b16 %v211
    %v251 = vunpack.c.l.b16 %v212
    %v252 = vunpack.c.l.b16 %v213
    %v253 = vunpack.c.l.b16 %v214
    %v254 = vunpack.c.l.b16 %v215
    %v255 = vpack.c.b16 %v240, %v239
    %v256 = vpack.c.b16 %v242, %v241
    %v257 = vpack.c.b16 %v244, %v243
    %v258 = vpack.c.b16 %v246, %v245
    %v259 = vpack.c.b16 %v248, %v247
    %v260 = vpack.c.b16 %v250, %v249
    %v261 = vpack.c.b16 %v252, %v251
    %v262 = vpack.c.b16 %v254, %v253
    %271 = vmatprep.subr.bf16.mxu0 0
    %272 = vmatpush1.bf16.msra.mxu0 %v255
    %273 = vmatprep.subr.bf16.mxu0 0
    %274 = vmatpush1.bf16.msra.mxu0 %v256
    %275 = vmatprep.subr.bf16.mxu0 0
    %276 = vmatpush1.bf16.msra.mxu0 %v257
    %277 = vmatprep.subr.bf16.mxu0 0
    %278 = vmatpush1.bf16.msra.mxu0 %v258
    %279 = vmatprep.subr.bf16.mxu0 0
    %280 = vmatpush1.bf16.msra.mxu0 %v259
    %281 = vmatprep.subr.bf16.mxu0 0
    %282 = vmatpush1.bf16.msra.mxu0 %v260
    %283 = vmatprep.subr.bf16.mxu0 0
    %284 = vmatpush1.bf16.msra.mxu0 %v261
    %285 = vmatprep.subr.bf16.mxu0 0
    %286 = vmatpush1.bf16.msra.mxu0 %v262
    %287 = vmatprep.subr.bf16.mxu0 0
    %288 = vmatpush1.bf16.msra.mxu0 0
    %289 = vmatprep.subr.bf16.mxu0 0
    %290 = vmatpush1.bf16.msra.mxu0 0
    %291 = vmatprep.subr.bf16.mxu0 0
    %292 = vmatpush1.bf16.msra.mxu0 0
    %293 = vmatprep.subr.bf16.mxu0 0
    %294 = vmatpush1.bf16.msra.mxu0 0
    %295 = vmatprep.subr.bf16.mxu0 0
    %296 = vmatpush1.bf16.msra.mxu0 0
    %297 = vmatprep.subr.bf16.mxu0 0
    %298 = vmatpush1.bf16.msra.mxu0 0
    %299 = vmatprep.subr.bf16.mxu0 0
    %300 = vmatpush1.bf16.msra.mxu0 0
    %301 = vmatprep.subr.bf16.mxu0 0
    %302 = vmatpush1.bf16.msra.mxu0 0
    %303 = vmatprep.mubr.bf16.mxu0 0
    %304 = vmatmul.mubr.bf16.gmra.mrb[0].mxu0 %v216
    %v305 = vpop.f32.mrb[0].mxu0
    %v306 = vadd.f32 %v222, %v305
    %v307 = vpop.f32.mrb[0].mxu0
    %v308 = vpop.f32.mrb[0].mxu0
    %v309 = vpop.f32.mrb[0].mxu0
    %310 = vdwg.mxu0
    %v311 = vtanh.pop %v306
    %v312 = vmul.f32 %v311, 2.0
    %vm313 = vcmask 31744
    %314 = vst.msk [vmem:[%s2] sm:$0xff] %vm313, %v312
    // Predicated region
    $region14: #{mlp_actor_forward.1} parent=1 // pred_check
      _
    $region15: #{mlp_actor_forward.1} parent=1 // pred_check_branch
      %316 = sbr.rel (0) target = $region17
    $region16: #{mlp_actor_forward.1} parent=1 // pred_region
      _
    $region17: #{mlp_actor_forward.1} parent=1 // pred_fallthru
      _
    // Predicated region
    $region18: #{mlp_actor_forward.1} parent=1 // pred_check
      _
    $region19: #{mlp_actor_forward.1} parent=1 // pred_check_branch
      %318 = sbr.rel (0) target = $region21
    $region20: #{mlp_actor_forward.1} parent=1 // pred_region
      _
    $region21: #{mlp_actor_forward.1} parent=1 // pred_fallthru
      _
    %319 = vsyncpa [#allocation3], 1

</llo_original>
